<compile_context>
chip_gen: v6e
topology: v6e:2x2x1
jax: 0.10.0
libtpu: 0.0.40
codegen_flags: <defaults>
</compile_context>

<pallas_src>
import functools

import jax
import jax.numpy as jnp
from jax.experimental import pallas as pl
from jax.experimental.pallas import tpu as pltpu

K1 = 128  # packed lane width of the fused stage-1 operand (one vreg lane span)


def _round_up(x, m):
    return (x + m - 1) // m * m


def two_layer_rio_kernel(feat_ref, w1_ref, w2_ref, out_ref, *, embed_dim):
    """One (TN, F) row-tile of nodes.

    w1 (F, K1):   cols [0:D)     = w_embed.T  (inter2 embedding projection)
                  cols [D:D+C)   = w_label    (inter2 label layer)
    w2 (K1, 2C):  rows [0:D)   x cols [0:C)   = weight.T  (classifier)
                  rows [D:D+C) x cols [C:2C)  = I_C       (label pass-through)
    out (TN, 2C): cols [0:C) = scores2.t(),   cols [C:2C) = label_scores_two
    """
    # Fused stage 1: one MXU push computes both feat-consuming projections.
    h = jnp.dot(feat_ref[...], w1_ref[...],
                preferred_element_type=jnp.float32)            # (TN, K1) f32

    # ReLU only on the embedding columns; label columns pass through un-ReLU'd.
    lane = jax.lax.broadcasted_iota(jnp.int32, h.shape, dimension=1)
    h = jnp.where(lane < embed_dim, jnp.maximum(h, 0.0), h)

    # Fused stage 2: classifier + identity pass-through in one small matmul,
    # emitting only the 2C useful output lanes (no wide slab writeback).
    out_ref[...] = jnp.dot(h.astype(w2_ref.dtype), w2_ref[...],
                           preferred_element_type=jnp.float32
                           ).astype(out_ref.dtype)


def two_layer_rio_forward(feat_sel, w_embed, w_label, weight, last_label_scores,
                          *, tile_n=2048, compute_dtype=jnp.bfloat16):
    """Pallas-backed equivalent of TwoLayerRio.forward.

    Returns (scores2.t(), label_scores_one, label_scores_two)."""
    N, F = feat_sel.shape
    D, _ = w_embed.shape
    C = weight.shape[0]
    out2 = 2 * C
    assert D + C <= K1, "packed stage-1 layout overflow"

    # Host-side weight packing / pre-transposition (layout plumbing, free).
    w1 = jnp.zeros((F, K1), jnp.float32)
    w1 = w1.at[:, :D].set(w_embed.T)
    w1 = w1.at[:, D:D + C].set(w_label)
    w2 = jnp.zeros((K1, out2), jnp.float32)
    w2 = w2.at[:D, :C].set(weight.T)
    w2 = w2.at[D:D + C, C:out2].set(jnp.eye(C, dtype=jnp.float32))

    feat = feat_sel.astype(compute_dtype)      # bf16 default: MXU-native
    w1 = w1.astype(compute_dtype)
    w2 = w2.astype(compute_dtype)
    in_item = jnp.dtype(compute_dtype).itemsize
    out_item = 4  # f32 outputs

    # Row-tile size: >=2 tiles when possible (v7x: 2 TCs split the "parallel"
    # axis), multiple of 8 sublanes, and shrunk if the double-buffered working
    # set would not fit v5e's 16 MiB default scoped VMEM (guard for large F).
    tn = max(8, min(_round_up(tile_n, 8), _round_up(pl.cdiv(N, 2), 8)))

    def vmem_bytes(t):
        return (2 * t * F * in_item          # feat, double-buffered
                + 2 * F * K1 * in_item       # w1 (replicated, 2 buffers)
                + 2 * K1 * out2 * in_item    # w2
                + 2 * t * out2 * out_item)   # out, double-buffered

    VMEM_BUDGET = 12 * 1024 * 1024           # headroom under v5e's 16 MiB default
    while tn > 8 and vmem_bytes(tn) > VMEM_BUDGET:
        tn = max(8, _round_up(tn // 2, 8))

    grid = (pl.cdiv(N, tn),)   # ragged last block: OOB reads padded, OOB writes dropped

    cost = pl.CostEstimate(
        flops=2 * N * (F * K1 + K1 * out2),
        transcendentals=0,
        bytes_accessed=(N * F * in_item + F * K1 * in_item
                        + K1 * out2 * in_item + N * out2 * out_item))

    packed = pl.pallas_call(
        functools.partial(two_layer_rio_kernel, embed_dim=D),
        out_shape=jax.ShapeDtypeStruct((N, out2), jnp.float32),
        grid=grid,
        in_specs=[
            pl.BlockSpec((tn, F), lambda i: (i, 0)),
            pl.BlockSpec((F, K1), lambda i: (0, 0)),
            pl.BlockSpec((K1, out2), lambda i: (0, 0)),
        ],
        out_specs=pl.BlockSpec((tn, out2), lambda i: (i, 0)),
        compiler_params=pltpu.CompilerParams(
            dimension_semantics=("parallel",)),  # v7x: row tiles split over 2 TCs
        cost_estimate=cost,
    )(feat, w1, w2)

    scores2_t = packed[:, :C]
    label_scores_two = packed[:, C:out2]
    # label_scores_one is the stored buffer self.last_label_scores (passthrough).
    return scores2_t, last_label_scores, label_scores_two


def xavier_uniform(key, shape):
    fan_out, fan_in = shape
    bound = jnp.sqrt(6.0 / (fan_in + fan_out))
    return jax.random.uniform(key, shape, jnp.float32, -bound, bound)


def ref_forward(feat, w_embed, w_label, weight, dtype=jnp.bfloat16):
    """f32 reference with inputs quantized to the kernel's compute dtype."""
    f = feat.astype(dtype).astype(jnp.float32)
    we = w_embed.astype(dtype).astype(jnp.float32)
    wl = w_label.astype(dtype).astype(jnp.float32)
    w = weight.astype(dtype).astype(jnp.float32)
    embeds2 = jnp.maximum(we @ f.T, 0.0)            # (D, N)
    scores2_t = (w @ embeds2).T                     # (N, C)
    label_scores_two = f @ wl                       # (N, C)
    return scores2_t, label_scores_two


if __name__ == "__main__":
    # Small shapes consistent with the module.
    num_classes = 2      # C
    embed_dim = 32       # D  (inter2.embed_dim)
    feat_dim = 16        # F  (raw node feature dim fed to inter2)
    num_total_nodes = 20
    batch_nodes = 8      # N  (len(nodes))

    key = jax.random.PRNGKey(0)
    k_feat, k_we, k_wl, k_w, k_last, k_nodes = jax.random.split(key, 6)

    features = jax.random.normal(k_feat, (num_total_nodes, feat_dim), jnp.float32)
    nodes = jax.random.permutation(k_nodes, num_total_nodes)[:batch_nodes]
    feat_sel = features[nodes]                                    # (N, F)

    # Deterministic parameter init (shapes from __init__ / stubbed inter2).
    weight = xavier_uniform(k_w, (num_classes, embed_dim))        # nn.Parameter(C, D)
    w_embed = xavier_uniform(k_we, (embed_dim, feat_dim))         # inter2 projection
    w_label = xavier_uniform(k_wl, (num_classes, feat_dim)).T     # inter2 label layer (F, C)
    last_label_scores = jax.random.normal(k_last,
                                          (batch_nodes, num_classes), jnp.float32)

    # 1) Small batch, single tile.
    scores2_t, l1, l2 = two_layer_rio_forward(
        feat_sel, w_embed, w_label, weight, last_label_scores)
    jax.block_until_ready((scores2_t, l1, l2))
    s_ref, l2_ref = ref_forward(feat_sel, w_embed, w_label, weight)
    assert jnp.allclose(scores2_t, s_ref, atol=5e-2, rtol=5e-2)
    assert jnp.allclose(l2, l2_ref, atol=5e-2, rtol=5e-2)
    assert jnp.allclose(l1, last_label_scores)

    # 2) Multi-tile grid with a ragged last block (N=20, tn=8 -> 3 steps).
    feat_all = features
    last_all = jax.random.normal(k_last, (num_total_nodes, num_classes), jnp.float32)
    s2, l1b, l2b = two_layer_rio_forward(
        feat_all, w_embed, w_label, weight, last_all, tile_n=8)
    jax.block_until_ready((s2, l1b, l2b))
    s_ref2, l2_ref2 = ref_forward(feat_all, w_embed, w_label, weight)
    assert jnp.allclose(s2, s_ref2, atol=5e-2, rtol=5e-2)
    assert jnp.allclose(l2b, l2_ref2, atol=5e-2, rtol=5e-2)
    assert jnp.allclose(l1b, last_all)

    # 3) Larger ragged batch on the default tile path (>=2 tiles for v7x).
    n_big = 300
    feat_big = jax.random.normal(jax.random.PRNGKey(1), (n_big, feat_dim), jnp.float32)
    last_big = jnp.zeros((n_big, num_classes), jnp.float32)
    s2b, _, l2c = two_layer_rio_forward(feat_big, w_embed, w_label, weight, last_big)
    jax.block_until_ready((s2b, l2c))
    s_ref3, l2_ref3 = ref_forward(feat_big, w_embed, w_label, weight)
    assert jnp.allclose(s2b, s_ref3, atol=5e-2, rtol=5e-2)
    assert jnp.allclose(l2c, l2_ref3, atol=5e-2, rtol=5e-2)

    print("KERNEL_OK")
</pallas_src>

<mosaic_0001>
module attributes {stable_mosaic.version = 11 : i64} {
  func.func @two_layer_rio_kernel(%arg0: i32, %arg1: memref<8x16xbf16, #tpu.memory_space<vmem>>, %arg2: memref<16x128xbf16, #tpu.memory_space<vmem>>, %arg3: memref<128x4xbf16, #tpu.memory_space<vmem>>, %arg4: memref<8x4xf32, #tpu.memory_space<vmem>>) attributes {dimension_semantics = [#tpu.dimension_semantics<parallel>], iteration_bounds = array<i64: 1>, scalar_prefetch = 0 : i64, scratch_operands = 0 : i64, tpu.core_type = #tpu.core_type<tc>, window_params = [{transform_indices = @transform_0, window_bounds = array<i64: 8, 16>}, {pipeline_mode = #tpu.pipeline_mode<synchronous>, transform_indices = @transform_1, window_bounds = array<i64: 16, 128>}, {pipeline_mode = #tpu.pipeline_mode<synchronous>, transform_indices = @transform_2, window_bounds = array<i64: 128, 4>}, {transform_indices = @transform_3, window_bounds = array<i64: 8, 4>}]} {
    %c0 = arith.constant 0 : index
    %c0_0 = arith.constant 0 : index
    %0 = vector.load %arg1[%c0, %c0_0] : memref<8x16xbf16, #tpu.memory_space<vmem>>, vector<8x16xbf16>
    %c0_1 = arith.constant 0 : index
    %c0_2 = arith.constant 0 : index
    %1 = vector.load %arg2[%c0_1, %c0_2] : memref<16x128xbf16, #tpu.memory_space<vmem>>, vector<16x128xbf16>
    %cst = arith.constant dense<0.000000e+00> : vector<8x128xf32>
    %2 = tpu.matmul %0, %1, %cst {dimension_numbers = #tpu.dot_dimension_numbers<[1], [0], [0], [1], [0, 0, 1, 1], [], []>} : vector<8x16xbf16>, vector<16x128xbf16>, vector<8x128xf32> -> vector<8x128xf32>
    %3 = tpu.iota {dimensions = array<i32: 1>} : vector<8x128xi32>
    %c32_i32 = arith.constant 32 : i32
    %4 = vector.broadcast %c32_i32 : i32 to vector<8x128xi32>
    %5 = arith.cmpi slt, %3, %4 : vector<8x128xi32>
    %cst_3 = arith.constant 0.000000e+00 : f32
    %6 = vector.broadcast %cst_3 : f32 to vector<8x128xf32>
    %7 = arith.maximumf %2, %6 : vector<8x128xf32>
    %8 = arith.select %5, %7, %2 : vector<8x128xi1>, vector<8x128xf32>
    %9 = arith.truncf %8 : vector<8x128xf32> to vector<8x128xbf16>
    %c0_4 = arith.constant 0 : index
    %c0_5 = arith.constant 0 : index
    %10 = vector.load %arg3[%c0_4, %c0_5] : memref<128x4xbf16, #tpu.memory_space<vmem>>, vector<128x4xbf16>
    %cst_6 = arith.constant dense<0.000000e+00> : vector<8x4xf32>
    %11 = tpu.matmul %9, %10, %cst_6 {dimension_numbers = #tpu.dot_dimension_numbers<[1], [0], [0], [1], [0, 0, 1, 1], [], []>} : vector<8x128xbf16>, vector<128x4xbf16>, vector<8x4xf32> -> vector<8x4xf32>
    %c0_7 = arith.constant 0 : index
    %c0_8 = arith.constant 0 : index
    %12 = vector.load %arg4[%c0_7, %c0_8] : memref<8x4xf32, #tpu.memory_space<vmem>>, vector<8x4xf32>
    tpu.vector_store %arg4[%c0_7, %c0_8], %11 {strides = array<i32>} : memref<8x4xf32, #tpu.memory_space<vmem>>, vector<8x4xf32>,
    return
  }
  func.func @transform_0(%arg0: i32) -> (i32, i32) {
    %c0_i32 = arith.constant 0 : i32
    %c0_i32_0 = arith.constant 0 : i32
    return %arg0, %c0_i32 : i32, i32
  }
  func.func @transform_1(%arg0: i32) -> (i32, i32) {
    %c0_i32 = arith.constant 0 : i32
    %c0_i32_0 = arith.constant 0 : i32
    %c0_i32_1 = arith.constant 0 : i32
    return %c0_i32, %c0_i32_0 : i32, i32
  }
  func.func @transform_2(%arg0: i32) -> (i32, i32) {
    %c0_i32 = arith.constant 0 : i32
    %c0_i32_0 = arith.constant 0 : i32
    %c0_i32_1 = arith.constant 0 : i32
    return %c0_i32, %c0_i32_0 : i32, i32
  }
  func.func @transform_3(%arg0: i32) -> (i32, i32) {
    %c0_i32 = arith.constant 0 : i32
    %c0_i32_0 = arith.constant 0 : i32
    return %arg0, %c0_i32 : i32, i32
  }
}

</mosaic_0001>

<llo_original>
// kernel: tpu_custom_call.1
$region0: #{tpu_custom_call.1}
  #allocation0 [shape = 'u32[]', space=smem, size = 0x4, offset = 0x4, fixed_abs, tag = 'smem constant byte address 0x4 - core index']
  #allocation1 [shape = 'u32[144,128]{1,0:T(1,128)}', space=vmem, size = 0x12000, scoped, tag = 'internal scratch']
  %s0 = inlined_call_operand.vmem [shape: bf16[8,16], index: 0, kind: input, shape index: {}]
  %s1 = inlined_call_operand.vmem [shape: bf16[16,128], index: 1, kind: input, shape index: {}]
  %s2 = inlined_call_operand.vmem [shape: bf16[128,4], index: 2, kind: input, shape index: {}]
  %s3 = inlined_call_operand.vmem [shape: f32[8,4], index: 3, kind: output, shape index: {}]
  %s4 = sld [smem:[#allocation0]]
  $region22: #{tpu_custom_call.1} parent=0
    _
  %s6 = ssub.s32 1, %s4
  %s7 = scalar_select 0, %s6, %s4
  // Predicated region
  $region2: #{tpu_custom_call.1} parent=0 // pred_check
    _
  $region3: #{tpu_custom_call.1} parent=0 // pred_check_branch
    %9 = sbr.rel (0) target = $region5
  $region4: #{tpu_custom_call.1} parent=0 // pred_region
    _
  $region5: #{tpu_custom_call.1} parent=0 // pred_fallthru
    _
  // Predicated region
  $region6: #{tpu_custom_call.1} parent=0 // pred_check
    _
  $region7: #{tpu_custom_call.1} parent=0 // pred_check_branch
    %11 = sbr.rel (0) target = $region9
  $region8: #{tpu_custom_call.1} parent=0 // pred_region
    _
  $region9: #{tpu_custom_call.1} parent=0 // pred_fallthru
    _
  // Predicated region
  $region10: #{tpu_custom_call.1} parent=0 // pred_check
    _
  $region11: #{tpu_custom_call.1} parent=0 // pred_check_branch
    %13 = sbr.rel (0) target = $region13
  $region12: #{tpu_custom_call.1} parent=0 // pred_region
    _
  $region13: #{tpu_custom_call.1} parent=0 // pred_fallthru
    _
  %v15 = vld [vmem:[%s0] sm:$0xf]
  %v16 = vld [vmem:[%s1] sm:$0xf]
  %v17 = vld [vmem:[%s1 + $0x4] sm:$0xf]
  %v20 = vunpack.c.l.b16 %v16
  %v21 = vunpack.c.l.b16 %v17
  %v22 = vpack.c.b16 %v21, %v20
  %vm24 = vcmask 130048
  %v26 = vsel %vm24, %v15, 0
  %28 = vmatprep.subr.bf16.mxu0 0
  %29 = vmatpush1.bf16.msra.mxu0 0
  %30 = vmatprep.subr.bf16.mxu0 0
  %31 = vmatpush1.bf16.msra.mxu0 0
  %32 = vmatprep.subr.bf16.mxu0 0
  %33 = vmatpush1.bf16.msra.mxu0 0
  %34 = vmatprep.subr.bf16.mxu0 0
  %35 = vmatpush1.bf16.msra.mxu0 0
  %36 = vmatprep.subr.bf16.mxu0 0
  %37 = vmatpush1.bf16.msra.mxu0 0
  %38 = vmatprep.subr.bf16.mxu0 0
  %39 = vmatpush1.bf16.msra.mxu0 0
  %40 = vmatprep.subr.bf16.mxu0 0
  %41 = vmatpush1.bf16.msra.mxu0 0
  %42 = vmatprep.subr.bf16.mxu0 0
  %43 = vmatpush1.bf16.msra.mxu0 %v22
  %44 = vmatprep.subr.bf16.mxu0 0
  %45 = vmatpush2.bf16.msra.mxu0 0
  %46 = vmatprep.subr.bf16.mxu0 0
  %47 = vmatpush2.bf16.msra.mxu0 0
  %48 = vmatprep.subr.bf16.mxu0 0
  %49 = vmatpush2.bf16.msra.mxu0 0
  %50 = vmatprep.subr.bf16.mxu0 0
  %51 = vmatpush2.bf16.msra.mxu0 0
  %52 = vmatprep.subr.bf16.mxu0 0
  %53 = vmatpush2.bf16.msra.mxu0 0
  %54 = vmatprep.subr.bf16.mxu0 0
  %55 = vmatpush2.bf16.msra.mxu0 0
  %56 = vmatprep.subr.bf16.mxu0 0
  %57 = vmatpush2.bf16.msra.mxu0 0
  %58 = vmatprep.subr.bf16.mxu0 0
  %59 = vmatpush2.bf16.msra.mxu0 0
  %60 = vmatprep.mubr.bf16.mxu0 0
  %61 = vmatmul.mubr.bf16.gmra.mxu0 %v26
  %v62 = vpop.f32.mrf.mxu0
  %v63 = vadd.f32 0.0, %v62
  %v64 = vpop.f32.mrf.mxu0
  %v65 = vpop.f32.mrf.mxu0
  %v66 = vpop.f32.mrf.mxu0
  %67 = vdwg.mxu0
  %v68 = vlaneseq
  %v69 = vand.u32 %v68, 127
  %vm70 = vcmp.lt.s32.totalorder %v69, 32
  %v71 = vmax.f32 %v63, 0.0
  %v72 = vsel %vm70, %v71, %v63
  %v73 = vpack.c.bf16 %v72, %v72
  %v74 = vld [vmem:[%s2] sm:$0xf]
  %v75 = vld [vmem:[%s2 + $0x4] sm:$0xf]
  %v76 = vld [vmem:[%s2 + $0x8] sm:$0xf]
  %v77 = vld [vmem:[%s2 + $0xc] sm:$0xf]
  %v78 = vld [vmem:[%s2 + $0x10] sm:$0xf]
  %v79 = vld [vmem:[%s2 + $0x14] sm:$0xf]
  %v80 = vld [vmem:[%s2 + $0x18] sm:$0xf]
  %v81 = vld [vmem:[%s2 + $0x1c] sm:$0xf]
  %v82 = vld [vmem:[%s2 + $0x20] sm:$0xf]
  %v83 = vld [vmem:[%s2 + $0x24] sm:$0xf]
  %v84 = vld [vmem:[%s2 + $0x28] sm:$0xf]
  %v85 = vld [vmem:[%s2 + $0x2c] sm:$0xf]
  %v86 = vld [vmem:[%s2 + $0x30] sm:$0xf]
  %v87 = vld [vmem:[%s2 + $0x34] sm:$0xf]
  %v88 = vld [vmem:[%s2 + $0x38] sm:$0xf]
  %v89 = vld [vmem:[%s2 + $0x3c] sm:$0xf]
  %v106 = vunpack.c.l.b16 %v74
  %v107 = vunpack.c.l.b16 %v75
  %v108 = vunpack.c.l.b16 %v76
  %v109 = vunpack.c.l.b16 %v77
  %v110 = vunpack.c.l.b16 %v78
  %v111 = vunpack.c.l.b16 %v79
  %v112 = vunpack.c.l.b16 %v80
  %v113 = vunpack.c.l.b16 %v81
  %v114 = vunpack.c.l.b16 %v82
  %v115 = vunpack.c.l.b16 %v83
  %v116 = vunpack.c.l.b16 %v84
  %v117 = vunpack.c.l.b16 %v85
  %v118 = vunpack.c.l.b16 %v86
  %v119 = vunpack.c.l.b16 %v87
  %v120 = vunpack.c.l.b16 %v88
  %v121 = vunpack.c.l.b16 %v89
  %v122 = vpack.c.b16 %v107, %v106
  %v123 = vpack.c.b16 %v109, %v108
  %v124 = vpack.c.b16 %v111, %v110
  %v125 = vpack.c.b16 %v113, %v112
  %v126 = vpack.c.b16 %v115, %v114
  %v127 = vpack.c.b16 %v117, %v116
  %v128 = vpack.c.b16 %v119, %v118
  %v129 = vpack.c.b16 %v121, %v120
  %138 = vmatprep.subr.bf16.mxu0 0
  %139 = vmatpush1.bf16.msra.mxu0 %v129
  %140 = vmatprep.subr.bf16.mxu0 0
  %141 = vmatpush1.bf16.msra.mxu0 %v128
  %142 = vmatprep.subr.bf16.mxu0 0
  %143 = vmatpush1.bf16.msra.mxu0 %v127
  %144 = vmatprep.subr.bf16.mxu0 0
  %145 = vmatpush1.bf16.msra.mxu0 %v126
  %146 = vmatprep.subr.bf16.mxu0 0
  %147 = vmatpush1.bf16.msra.mxu0 %v125
  %148 = vmatprep.subr.bf16.mxu0 0
  %149 = vmatpush1.bf16.msra.mxu0 %v124
  %150 = vmatprep.subr.bf16.mxu0 0
  %151 = vmatpush1.bf16.msra.mxu0 %v123
  %152 = vmatprep.subr.bf16.mxu0 0
  %153 = vmatpush1.bf16.msra.mxu0 %v122
  %154 = vmatprep.subr.bf16.mxu0 0
  %155 = vmatpush2.bf16.msra.mxu0 0
  %156 = vmatprep.subr.bf16.mxu0 0
  %157 = vmatpush2.bf16.msra.mxu0 0
  %158 = vmatprep.subr.bf16.mxu0 0
  %159 = vmatpush2.bf16.msra.mxu0 0
  %160 = vmatprep.subr.bf16.mxu0 0
  %161 = vmatpush2.bf16.msra.mxu0 0
  %162 = vmatprep.subr.bf16.mxu0 0
  %163 = vmatpush2.bf16.msra.mxu0 0
  %164 = vmatprep.subr.bf16.mxu0 0
  %165 = vmatpush2.bf16.msra.mxu0 0
  %166 = vmatprep.subr.bf16.mxu0 0
  %167 = vmatpush2.bf16.msra.mxu0 0
  %168 = vmatprep.subr.bf16.mxu0 0
  %169 = vmatpush2.bf16.msra.mxu0 0
  %170 = vmatprep.mubr.bf16.mxu0 0
  %171 = vmatmul.mubr.bf16.gmra.mxu0 %v73
  %v172 = vpop.f32.mrf.mxu0
  %v173 = vadd.f32 0.0, %v172
  %v174 = vpop.f32.mrf.mxu0
  %v175 = vpop.f32.mrf.mxu0
  %v176 = vpop.f32.mrf.mxu0
  %177 = vdwg.mxu0
  %vm178 = vcmask 31744
  %179 = vst.msk [vmem:[%s3] sm:$0xff] %vm178, %v173
  // Predicated region
  $region14: #{tpu_custom_call.1} parent=0 // pred_check
    _
  $region15: #{tpu_custom_call.1} parent=0 // pred_check_branch
    %181 = sbr.rel (0) target = $region17
  $region16: #{tpu_custom_call.1} parent=0 // pred_region
    _
  $region17: #{tpu_custom_call.1} parent=0 // pred_fallthru
    _
  // Predicated region
  $region18: #{tpu_custom_call.1} parent=0 // pred_check
    _
  $region19: #{tpu_custom_call.1} parent=0 // pred_check_branch
    %183 = sbr.rel (0) target = $region21
  $region20: #{tpu_custom_call.1} parent=0 // pred_region
    _
  $region21: #{tpu_custom_call.1} parent=0 // pred_fallthru
    _

</llo_original>
